<compile_context>
chip_gen: v5e
topology: v5e:2x2
jax: 0.10.0
libtpu: 0.0.40
codegen_flags: <defaults>
</compile_context>

<pallas_src>
import numpy as np
import jax
import jax.numpy as jnp
from jax.experimental import pallas as pl
from jax.experimental.pallas import tpu as pltpu

# ---- sizes (small, deterministic, consistent with the module's __init__) ----
G_DIM = 32                                   # g_i span representation dim
DIST_DIM, GENRE_DIM, SPK_DIM = 8, 8, 8       # distance/genre/speaker embed dims
PHI_DIM = DIST_DIM + GENRE_DIM + SPK_DIM     # 24
GIJ_DIM = 3 * G_DIM + PHI_DIM                # 120  (Score input dim = gij_dim)
K_PAD = 128                                  # GIJ_DIM zero-padded to a full lane width
HID = 64                                     # Score hidden dim (150 in corefai; small here)
L_PAD = 128                                  # softmax lane width (padded + masked)

TPL_UNIT, TPL_MAX = 256, 1024                # pair-lane tile: multiple of 256, up to 1024
TR_UNIT, TR_MAX = 8, 512                     # softmax row tile: multiple of 8, up to 512

DIST_BINS = np.array([1, 2, 3, 4, 8, 16, 32, 64])
N_DIST = len(DIST_BINS) + 1                  # 9 distance buckets
N_GENRE = 7
N_SPK = 3                                    # same / different / unknown speaker


def _round_up(x, m):
    return ((x + m - 1) // m) * m


def _pair_tiles(p):
    """Pair-lane tile and padded pair count (static, shape-derived)."""
    tpl = min(TPL_MAX, _round_up(max(p, 1), TPL_UNIT))
    return tpl, _round_up(max(p, 1), tpl)


def _row_tiles(r):
    """Softmax row tile and padded row count (static, shape-derived)."""
    tr = min(TR_MAX, _round_up(max(r, 1), TR_UNIT))
    return tr, _round_up(max(r, 1), tr)


# ------------------------- Pallas kernel 1: pair MLP --------------------------
def pair_score_kernel(pt_ref, ssum_ref, w1t_ref, w2t_ref, aux_ref, out_ref):
    """coref_scores^T = s_i + s_j + b3 + Score(cat(i_g, j_g, i_g*j_g, phi)), transposed.

    pt_ref  [K_PAD, TPL] bf16 : pairs^T (features on sublanes, pairs on lanes)
    ssum    [1, TPL]     f32  : (s_i + s_j + b3)^T
    w1t     [HID, K_PAD] f32  : W1^T (K rows zero-padded 120->128), resident
    w2t     [HID, HID]   f32  : W2^T, resident
    aux     [HID, 128]   f32  : packed small params — col0=b1, col1=b2, col2=w3
    out     [1, TPL]     f32  : lane-dense coref scores
    """
    # bf16 storage, f32 compute: the cast is a cheap VPU op and keeps the dot
    # in F32xF32=F32 (MXU on TPU; supported everywhere, unlike BF16xBF16=F32).
    pt = pt_ref[...].astype(jnp.float32)
    b1 = aux_ref[:, 0:1]
    b2 = aux_ref[:, 1:2]
    w3 = aux_ref[:, 2:3]
    h1 = jnp.dot(w1t_ref[...], pt, preferred_element_type=jnp.float32) + b1
    h1 = jnp.maximum(h1, 0.0)                       # ReLU (Dropout = identity, eval)
    h2 = jnp.dot(w2t_ref[...], h1, preferred_element_type=jnp.float32) + b2
    h2 = jnp.maximum(h2, 0.0)
    # Last Linear(hid, 1): VPU multiply + sublane reduce instead of an N=1 MXU op.
    s_ij = jnp.sum(h2 * w3, axis=0, keepdims=True)  # [1, TPL]
    out_ref[...] = ssum_ref[...] + s_ij


def pair_scores(pairs_t, s_sum, w1t, w2t, aux, *, tpl):
    k_pad, p_pad = pairs_t.shape
    assert p_pad % tpl == 0
    col = lambda rows: pl.BlockSpec((rows, tpl), lambda p: (0, p))   # tiled over pair lanes
    rep = lambda shape: pl.BlockSpec(shape, lambda p: (0, 0))        # weights, resident
    return pl.pallas_call(
        pair_score_kernel,
        out_shape=jax.ShapeDtypeStruct((1, p_pad), jnp.float32),
        grid=(p_pad // tpl,),
        in_specs=[col(k_pad), col(1),
                  rep((HID, k_pad)), rep((HID, HID)), rep((HID, 128))],
        out_specs=col(1),
        compiler_params=pltpu.CompilerParams(dimension_semantics=("parallel",)),
    )(pairs_t, s_sum, w1t, w2t, aux)


# -------------------- Pallas kernel 2: per-group softmax ----------------------
def group_softmax_kernel(scores_ref, lens_ref, out_ref):
    """Row-wise masked softmax; invalid slots written as 1000 (pad_and_stack value).

    scores [TR, L_PAD] f32  : grouped scores (epsilon slot already appended)
    lens   [TR, 1]     i32  : valid lanes per row (0 for padded rows)
    """
    s = scores_ref[...]
    lane = jax.lax.broadcasted_iota(jnp.int32, s.shape, dimension=1)
    m = lane < lens_ref[...]
    s_m = jnp.where(m, s, -1e30)                    # mask BEFORE exp: no inf anywhere
    mx = jnp.max(s_m, axis=-1, keepdims=True)
    e = jnp.where(m, jnp.exp(s_m - mx), 0.0)
    denom = jnp.maximum(jnp.sum(e, axis=-1, keepdims=True), 1e-30)   # all-masked rows safe
    out_ref[...] = jnp.where(m, e / denom, 1000.0)


def group_softmax(scores, lens_col, *, tr):
    r_pad, l_pad = scores.shape
    assert r_pad % tr == 0 and l_pad % 128 == 0
    blk = pl.BlockSpec((tr, l_pad), lambda r: (r, 0))
    lblk = pl.BlockSpec((tr, 1), lambda r: (r, 0))
    return pl.pallas_call(
        group_softmax_kernel,
        out_shape=jax.ShapeDtypeStruct((r_pad, l_pad), jnp.float32),
        grid=(r_pad // tr,),
        in_specs=[blk, lblk],
        out_specs=blk,
        compiler_params=pltpu.CompilerParams(dimension_semantics=("parallel",)),
    )(scores, lens_col)


# ------------------- fused device-side forward (single jit) -------------------
@jax.jit
def pairwise_forward(g_i, mention_scores, dist_emb, genre_emb, spk_emb,
                     w1, b1, w2, b2, w3, b3,
                     m_ids, a_ids, d_idx, genre_idx, spk_idx,
                     gather_idx, lens_col):
    p = m_ids.shape[0]
    tpl, p_pad = _pair_tiles(p)

    # Build pairs^T directly transposed and in bf16 (no f32 pad+transpose relayout).
    g_t = g_i.astype(jnp.bfloat16).T                                   # [G_DIM, N]
    i_gt = g_t[:, m_ids]                                               # [G_DIM, P]
    j_gt = g_t[:, a_ids]
    phi_t = jnp.concatenate([dist_emb[d_idx], genre_emb[genre_idx], spk_emb[spk_idx]],
                            axis=1).astype(jnp.bfloat16).T             # [PHI_DIM, P]
    pairs_t = jnp.concatenate([i_gt, j_gt, i_gt * j_gt, phi_t], axis=0)      # [120, P]
    pairs_t = jnp.pad(pairs_t, ((0, K_PAD - GIJ_DIM), (0, p_pad - p)))       # [128, P_pad]

    # s_i + s_j with b3 folded in (drops the [1,1] bias stream from the kernel).
    ms = mention_scores[:, 0]
    s_sum = ms[m_ids] + ms[a_ids] + b3[0]                               # [P]
    s_sum = jnp.pad(s_sum, (0, p_pad - p)).reshape(1, p_pad)

    # Weight views: resident f32 (tiny); small params packed into one block.
    w1t = jnp.pad(w1, ((0, K_PAD - GIJ_DIM), (0, 0))).T                 # [HID, 128]
    w2t = w2.T                                                          # [HID, HID]
    aux = jnp.zeros((HID, 128), jnp.float32)
    aux = aux.at[:, 0].set(b1).at[:, 1].set(b2).at[:, 2].set(w3[:, 0])

    coref_t = pair_scores(pairs_t, s_sum, w1t, w2t, aux, tpl=tpl)       # [1, P_pad]

    # Ragged -> padded grouping entirely on device. gather_idx is host-built
    # static metadata; index p_pad selects an appended 0.0 (epsilon / padding),
    # so padded-tail garbage pair columns are never read.
    flat = jnp.concatenate([coref_t[0], jnp.zeros((1,), jnp.float32)])  # [P_pad + 1]
    grouped = flat[gather_idx]                                          # [R_pad, L_PAD]
    r_pad = gather_idx.shape[0]
    tr = min(TR_MAX, r_pad)
    return group_softmax(grouped, lens_col, tr=tr)                      # [R_pad, L_PAD]


# ------------------------------- reference -----------------------------------
def reference_probs(g_i, mention_scores, dist_emb, genre_emb, spk_emb,
                    w1, b1, w2, b2, w3, b3,
                    m_ids, a_ids, d_idx, genres, spks, group_sizes, R, L):
    f = lambda x: np.asarray(x, np.float64)
    g_i, mention_scores = f(g_i), f(mention_scores)
    phi = np.concatenate([f(dist_emb)[d_idx], f(genre_emb)[genres], f(spk_emb)[spks]], axis=1)
    i_g, j_g = g_i[m_ids], g_i[a_ids]
    pairs = np.concatenate([i_g, j_g, i_g * j_g, phi], axis=1)
    h1 = np.maximum(pairs @ f(w1) + f(b1), 0.0)
    h2 = np.maximum(h1 @ f(w2) + f(b2), 0.0)
    coref = mention_scores[m_ids] + mention_scores[a_ids] + (h2 @ f(w3) + f(b3))   # [P, 1]
    out = np.full((R, L), 1000.0)
    out[0, 0] = 1.0                          # leading empty tensor -> softmax([epsilon]) = [1.0]
    off = 0
    for r, n in enumerate(group_sizes, start=1):
        grp = np.concatenate([coref[off:off + n, 0], np.array([0.0])])   # append epsilon
        e = np.exp(grp - grp.max())
        out[r, :n + 1] = e / e.sum()
        off += n
    return out


# --------------------------------- main ---------------------------------------
if __name__ == "__main__":
    key = jax.random.PRNGKey(0)
    ks = jax.random.split(key, 11)

    # bf16-representable parameters / span reps so the f64 reference and the
    # bf16-storage kernel differ only by the i_g*j_g product rounding.
    bf16ify = lambda x: x.astype(jnp.bfloat16).astype(jnp.float32)

    dist_emb = bf16ify(jax.random.normal(ks[0], (N_DIST, DIST_DIM), jnp.float32) * 0.1)
    genre_emb = bf16ify(jax.random.normal(ks[1], (N_GENRE, GENRE_DIM), jnp.float32) * 0.1)
    spk_emb = bf16ify(jax.random.normal(ks[2], (N_SPK, SPK_DIM), jnp.float32) * 0.1)
    w1 = bf16ify(jax.random.normal(ks[3], (GIJ_DIM, HID), jnp.float32) * 0.1)
    b1 = bf16ify(jax.random.normal(ks[4], (HID,), jnp.float32) * 0.1)
    w2 = bf16ify(jax.random.normal(ks[5], (HID, HID), jnp.float32) * 0.1)
    b2 = bf16ify(jax.random.normal(ks[6], (HID,), jnp.float32) * 0.1)
    w3 = bf16ify(jax.random.normal(ks[7], (HID, 1), jnp.float32) * 0.1)
    b3 = bf16ify(jax.random.normal(ks[8], (1,), jnp.float32) * 0.1)

    # synthetic spans + mention scores (module inputs)
    N_SPANS, K = 8, 4
    g_i = bf16ify(jax.random.normal(ks[9], (N_SPANS, G_DIM), jnp.float32))
    mention_scores = jax.random.normal(ks[10], (N_SPANS, 1), jnp.float32)
    span_bounds = [(2 * i, 2 * i + 1) for i in range(N_SPANS)]          # (i1, i2)

    # enumerate (i, j in i.yi) pairs exactly as the list comprehension does
    m_ids, a_ids, dists, genres, spks, group_sizes = [], [], [], [], [], []
    for i in range(N_SPANS):
        yi = list(range(max(0, i - K), i))
        if yi:
            group_sizes.append(len(yi))
        for j in yi:
            m_ids.append(i)
            a_ids.append(j)
            dists.append(span_bounds[i][1] - span_bounds[j][0])         # i.i2 - j.i1
            genres.append(i % N_GENRE)
            spks.append((i + j) % N_SPK)                                # speaker_label(i, j)
    P = len(m_ids)

    # Distance.stoi bucketing (host metadata, known before any device compute)
    d_idx = np.array([int(np.sum(d >= DIST_BINS)) for d in dists], np.int32)

    # ragged->padded grouping metadata for the on-device gather + softmax
    tpl, p_pad = _pair_tiles(P)
    R = 1 + len(group_sizes)                 # leading empty tensor + non-empty groups
    L = (max(group_sizes) + 1) if group_sizes else 1
    assert L <= L_PAD
    _, r_pad = _row_tiles(R)
    gather_idx = np.full((r_pad, L_PAD), p_pad, np.int32)   # p_pad -> appended 0.0 (epsilon/pad)
    lens_col = np.zeros((r_pad, 1), np.int32)               # valid lanes per row
    lens_col[0, 0] = 1                       # row 0: only epsilon
    off = 0
    for r, n in enumerate(group_sizes, start=1):
        gather_idx[r, :n] = np.arange(off, off + n, dtype=np.int32)
        lens_col[r, 0] = n + 1               # group scores + epsilon slot
        off += n

    probs_pad = pairwise_forward(
        g_i, mention_scores, dist_emb, genre_emb, spk_emb,
        w1, b1, w2, b2, w3, b3,
        jnp.array(m_ids, jnp.int32), jnp.array(a_ids, jnp.int32),
        jnp.array(d_idx), jnp.array(genres, jnp.int32), jnp.array(spks, jnp.int32),
        jnp.array(gather_idx), jnp.array(lens_col))
    probs = np.asarray(jax.block_until_ready(probs_pad))[:R, :L]   # squeezed probs [R, L]

    ref = reference_probs(g_i, mention_scores, dist_emb, genre_emb, spk_emb,
                          w1, b1, w2, b2, w3, b3,
                          m_ids, a_ids, d_idx, genres, spks, group_sizes, R, L)
    # tolerance covers bf16 pair storage (f32 compute) vs the f64 reference
    assert np.allclose(probs, ref, atol=2e-2, rtol=2e-2), \
        f"max err {np.max(np.abs(probs - ref))}"
    print("KERNEL_OK")
</pallas_src>

<mosaic_0001>
module attributes {stable_mosaic.version = 11 : i64} {
  func.func @pair_score_kernel(%arg0: i32, %arg1: memref<128x256xbf16, #tpu.memory_space<vmem>>, %arg2: memref<1x256xf32, #tpu.memory_space<vmem>>, %arg3: memref<64x128xf32, #tpu.memory_space<vmem>>, %arg4: memref<64x64xf32, #tpu.memory_space<vmem>>, %arg5: memref<64x128xf32, #tpu.memory_space<vmem>>, %arg6: memref<1x256xf32, #tpu.memory_space<vmem>>) attributes {dimension_semantics = [#tpu.dimension_semantics<parallel>], iteration_bounds = array<i64: 1>, scalar_prefetch = 0 : i64, scratch_operands = 0 : i64, tpu.core_type = #tpu.core_type<tc>, window_params = [{transform_indices = @transform_0, window_bounds = array<i64: 128, 256>}, {transform_indices = @transform_1, window_bounds = array<i64: 1, 256>}, {pipeline_mode = #tpu.pipeline_mode<synchronous>, transform_indices = @transform_2, window_bounds = array<i64: 64, 128>}, {pipeline_mode = #tpu.pipeline_mode<synchronous>, transform_indices = @transform_3, window_bounds = array<i64: 64, 64>}, {pipeline_mode = #tpu.pipeline_mode<synchronous>, transform_indices = @transform_4, window_bounds = array<i64: 64, 128>}, {transform_indices = @transform_5, window_bounds = array<i64: 1, 256>}]} {
    %c0 = arith.constant 0 : index
    %c0_0 = arith.constant 0 : index
    %0 = vector.load %arg1[%c0, %c0_0] : memref<128x256xbf16, #tpu.memory_space<vmem>>, vector<128x256xbf16>
    %1 = arith.extf %0 : vector<128x256xbf16> to vector<128x256xf32>
    %c0_1 = arith.constant 0 : index
    %c0_2 = arith.constant 0 : index
    %2 = vector.load %arg5[%c0_1, %c0_2] : memref<64x128xf32, #tpu.memory_space<vmem>>, vector<64x1xf32>
    %c0_3 = arith.constant 0 : index
    %c1 = arith.constant 1 : index
    %3 = vector.load %arg5[%c0_3, %c1] : memref<64x128xf32, #tpu.memory_space<vmem>>, vector<64x1xf32>
    %c0_4 = arith.constant 0 : index
    %c2 = arith.constant 2 : index
    %4 = vector.load %arg5[%c0_4, %c2] : memref<64x128xf32, #tpu.memory_space<vmem>>, vector<64x1xf32>
    %c0_5 = arith.constant 0 : index
    %c0_6 = arith.constant 0 : index
    %5 = vector.load %arg3[%c0_5, %c0_6] : memref<64x128xf32, #tpu.memory_space<vmem>>, vector<64x128xf32>
    %cst = arith.constant dense<0.000000e+00> : vector<64x256xf32>
    %6 = tpu.matmul %5, %1, %cst {dimension_numbers = #tpu.dot_dimension_numbers<[1], [0], [0], [1], [0, 0, 1, 1], [], []>} : vector<64x128xf32>, vector<128x256xf32>, vector<64x256xf32> -> vector<64x256xf32>
    %7 = vector.broadcast %2 : vector<64x1xf32> to vector<64x256xf32>
    %8 = arith.addf %6, %7 : vector<64x256xf32>
    %cst_7 = arith.constant 0.000000e+00 : f32
    %9 = vector.broadcast %cst_7 : f32 to vector<64x256xf32>
    %10 = arith.maximumf %8, %9 : vector<64x256xf32>
    %c0_8 = arith.constant 0 : index
    %c0_9 = arith.constant 0 : index
    %11 = vector.load %arg4[%c0_8, %c0_9] : memref<64x64xf32, #tpu.memory_space<vmem>>, vector<64x64xf32>
    %cst_10 = arith.constant dense<0.000000e+00> : vector<64x256xf32>
    %12 = tpu.matmul %11, %10, %cst_10 {dimension_numbers = #tpu.dot_dimension_numbers<[1], [0], [0], [1], [0, 0, 1, 1], [], []>} : vector<64x64xf32>, vector<64x256xf32>, vector<64x256xf32> -> vector<64x256xf32>
    %13 = vector.broadcast %3 : vector<64x1xf32> to vector<64x256xf32>
    %14 = arith.addf %12, %13 : vector<64x256xf32>
    %cst_11 = arith.constant 0.000000e+00 : f32
    %15 = vector.broadcast %cst_11 : f32 to vector<64x256xf32>
    %16 = arith.maximumf %14, %15 : vector<64x256xf32>
    %17 = vector.broadcast %4 : vector<64x1xf32> to vector<64x256xf32>
    %18 = arith.mulf %16, %17 : vector<64x256xf32>
    %cst_12 = arith.constant dense<0.000000e+00> : vector<256xf32>
    %19 = vector.multi_reduction <add>, %18, %cst_12 [0] : vector<64x256xf32> to vector<256xf32>
    %20 = vector.shape_cast %19 : vector<256xf32> to vector<1x256xf32>
    %c0_13 = arith.constant 0 : index
    %c0_14 = arith.constant 0 : index
    %21 = vector.load %arg2[%c0_13, %c0_14] : memref<1x256xf32, #tpu.memory_space<vmem>>, vector<1x256xf32>
    %22 = arith.addf %21, %20 : vector<1x256xf32>
    %c0_15 = arith.constant 0 : index
    %c0_16 = arith.constant 0 : index
    %23 = vector.load %arg6[%c0_15, %c0_16] : memref<1x256xf32, #tpu.memory_space<vmem>>, vector<1x256xf32>
    tpu.vector_store %arg6[%c0_15, %c0_16], %22 {strides = array<i32>} : memref<1x256xf32, #tpu.memory_space<vmem>>, vector<1x256xf32>,
    return
  }
  func.func @transform_0(%arg0: i32) -> (i32, i32) {
    %c0_i32 = arith.constant 0 : i32
    %c0_i32_0 = arith.constant 0 : i32
    return %c0_i32, %arg0 : i32, i32
  }
  func.func @transform_1(%arg0: i32) -> (i32, i32) {
    %c0_i32 = arith.constant 0 : i32
    %c0_i32_0 = arith.constant 0 : i32
    return %c0_i32, %arg0 : i32, i32
  }
  func.func @transform_2(%arg0: i32) -> (i32, i32) {
    %c0_i32 = arith.constant 0 : i32
    %c0_i32_0 = arith.constant 0 : i32
    %c0_i32_1 = arith.constant 0 : i32
    return %c0_i32, %c0_i32_0 : i32, i32
  }
  func.func @transform_3(%arg0: i32) -> (i32, i32) {
    %c0_i32 = arith.constant 0 : i32
    %c0_i32_0 = arith.constant 0 : i32
    %c0_i32_1 = arith.constant 0 : i32
    return %c0_i32, %c0_i32_0 : i32, i32
  }
  func.func @transform_4(%arg0: i32) -> (i32, i32) {
    %c0_i32 = arith.constant 0 : i32
    %c0_i32_0 = arith.constant 0 : i32
    %c0_i32_1 = arith.constant 0 : i32
    return %c0_i32, %c0_i32_0 : i32, i32
  }
  func.func @transform_5(%arg0: i32) -> (i32, i32) {
    %c0_i32 = arith.constant 0 : i32
    %c0_i32_0 = arith.constant 0 : i32
    return %c0_i32, %arg0 : i32, i32
  }
}

module attributes {stable_mosaic.version = 11 : i64} {
  func.func @group_softmax_kernel(%arg0: i32, %arg1: memref<8x128xf32, #tpu.memory_space<vmem>>, %arg2: memref<8x1xi32, #tpu.memory_space<vmem>>, %arg3: memref<8x128xf32, #tpu.memory_space<vmem>>) attributes {dimension_semantics = [#tpu.dimension_semantics<parallel>], iteration_bounds = array<i64: 1>, scalar_prefetch = 0 : i64, scratch_operands = 0 : i64, tpu.core_type = #tpu.core_type<tc>, window_params = [{transform_indices = @transform_0, window_bounds = array<i64: 8, 128>}, {transform_indices = @transform_1, window_bounds = array<i64: 8, 1>}, {transform_indices = @transform_2, window_bounds = array<i64: 8, 128>}]} {
    %c0 = arith.constant 0 : index
    %c0_0 = arith.constant 0 : index
    %0 = vector.load %arg1[%c0, %c0_0] : memref<8x128xf32, #tpu.memory_space<vmem>>, vector<8x128xf32>
    %1 = tpu.iota {dimensions = array<i32: 1>} : vector<8x128xi32>
    %c0_1 = arith.constant 0 : index
    %c0_2 = arith.constant 0 : index
    %2 = vector.load %arg2[%c0_1, %c0_2] : memref<8x1xi32, #tpu.memory_space<vmem>>, vector<8x1xi32>
    %3 = vector.broadcast %2 : vector<8x1xi32> to vector<8x128xi32>
    %4 = arith.cmpi slt, %1, %3 : vector<8x128xi32>
    %cst = arith.constant -1.000000e+30 : f32
    %5 = vector.broadcast %cst : f32 to vector<8x128xf32>
    %6 = arith.select %4, %0, %5 : vector<8x128xi1>, vector<8x128xf32>
    %cst_3 = arith.constant dense<0xFF800000> : vector<8xf32>
    %7 = vector.multi_reduction <maximumf>, %6, %cst_3 [1] : vector<8x128xf32> to vector<8xf32>
    %8 = vector.shape_cast %7 : vector<8xf32> to vector<8x1xf32>
    %9 = vector.broadcast %8 : vector<8x1xf32> to vector<8x128xf32>
    %10 = arith.subf %6, %9 : vector<8x128xf32>
    %11 = math.exp %10 : vector<8x128xf32>
    %cst_4 = arith.constant 0.000000e+00 : f32
    %12 = vector.broadcast %cst_4 : f32 to vector<8x128xf32>
    %13 = arith.select %4, %11, %12 : vector<8x128xi1>, vector<8x128xf32>
    %cst_5 = arith.constant dense<0.000000e+00> : vector<8xf32>
    %14 = vector.multi_reduction <add>, %13, %cst_5 [1] : vector<8x128xf32> to vector<8xf32>
    %15 = vector.shape_cast %14 : vector<8xf32> to vector<8x1xf32>
    %cst_6 = arith.constant 1.000000e-30 : f32
    %16 = vector.broadcast %cst_6 : f32 to vector<8x1xf32>
    %17 = arith.maximumf %15, %16 : vector<8x1xf32>
    %18 = vector.broadcast %17 : vector<8x1xf32> to vector<8x128xf32>
    %19 = arith.divf %13, %18 : vector<8x128xf32>
    %cst_7 = arith.constant 1.000000e+03 : f32
    %20 = vector.broadcast %cst_7 : f32 to vector<8x128xf32>
    %21 = arith.select %4, %19, %20 : vector<8x128xi1>, vector<8x128xf32>
    %c0_8 = arith.constant 0 : index
    %c0_9 = arith.constant 0 : index
    %22 = vector.load %arg3[%c0_8, %c0_9] : memref<8x128xf32, #tpu.memory_space<vmem>>, vector<8x128xf32>
    tpu.vector_store %arg3[%c0_8, %c0_9], %21 {strides = array<i32>} : memref<8x128xf32, #tpu.memory_space<vmem>>, vector<8x128xf32>,
    return
  }
  func.func @transform_0(%arg0: i32) -> (i32, i32) {
    %c0_i32 = arith.constant 0 : i32
    %c0_i32_0 = arith.constant 0 : i32
    return %arg0, %c0_i32 : i32, i32
  }
  func.func @transform_1(%arg0: i32) -> (i32, i32) {
    %c0_i32 = arith.constant 0 : i32
    %c0_i32_0 = arith.constant 0 : i32
    return %arg0, %c0_i32 : i32, i32
  }
  func.func @transform_2(%arg0: i32) -> (i32, i32) {
    %c0_i32 = arith.constant 0 : i32
    %c0_i32_0 = arith.constant 0 : i32
    return %arg0, %c0_i32 : i32, i32
  }
}

</mosaic_0001>

<llo_original>
// kernel: pairwise_forward.3
$region0: #{pairwise_forward.3}
  #allocation0 [shape = 'u32[]', space=smem, size = 0x4, offset = 0x4, fixed_abs, tag = 'smem constant byte address 0x4 - core index']
  #allocation1 [shape = 'u32[72,128]{1,0:T(1,128)}', space=vmem, size = 0x9000, scoped, tag = 'internal scratch']
  %s0 = inlined_call_operand.vmem [shape: f32[8,128], index: 0, kind: input, shape index: {}]
  %s1 = inlined_call_operand.vmem [shape: s32[8,1], index: 1, kind: input, shape index: {}]
  %s2 = inlined_call_operand.hbm [shape: f32[8,128], index: 2, kind: output, shape index: {}]
  %s3 = sld [smem:[#allocation0]]
  $region18: #{pairwise_forward.3} parent=0
    _
  %s5 = ssub.s32 1, %s3
  %s6 = scalar_select 0, %s5, %s3
  $region1: #{pairwise_forward.3} parent=0
    #allocation2 [shape = 'u8[4096]{0}', space=vmem, size = 0x1000, scoped, tag = 'output window, operand 0, single buffered']
    #allocation3 [shape = 's32[1]{0}', space=sflag, size = 0x4, scoped, tag = 'scoped memory for pairwise_forward.3']
    %7 = vsyncpa [#allocation3], 0
    // Predicated region
    $region2: #{pairwise_forward.3} parent=1 // pred_check
      _
    $region3: #{pairwise_forward.3} parent=1 // pred_check_branch
      %9 = sbr.rel (0) target = $region5
    $region4: #{pairwise_forward.3} parent=1 // pred_region
      _
    $region5: #{pairwise_forward.3} parent=1 // pred_fallthru
      _
    // Predicated region
    $region6: #{pairwise_forward.3} parent=1 // pred_check
      _
    $region7: #{pairwise_forward.3} parent=1 // pred_check_branch
      %11 = sbr.rel (0) target = $region9
    $region8: #{pairwise_forward.3} parent=1 // pred_region
      _
    $region9: #{pairwise_forward.3} parent=1 // pred_fallthru
      _
    %v12 = vld [vmem:[%s0] sm:$0xff]
    %v13 = vlaneseq
    %v14 = vand.u32 %v13, 127
    %v15 = vld [vmem:[%s1] sm:$0xff]
    %16 = vset.pattern.permute.xlu0 0
    %17 = vperm.xlu0 %16, %v15
    %v18 = vpop.permute.xlu0 %17
    %vm19 = vcmp.lt.s32.totalorder %v14, %v18
    %v20 = vsel %vm19, %v12, -1e+30
    %21 = vmax.xlane.f32.xlu0 %v20
    %v22 = vpop.xlane.xlu0 %21
    %v23 = vsub.f32 %v20, %v22
    %v24 = vmul.f32 %v23, 1.442695
    %v25 = vpow.pop %v24
    %v26 = vsel %vm19, %v25, 0.0
    %27 = vadd.xlane.f32.xlu0 %v26
    %v28 = vpop.xlane.xlu0 %27
    %v29 = vmax.f32 %v28, 1e-30
    %v30 = vrcp.pop %v29
    %v31 = vmul.f32 %v29, %v30
    %v32 = vsub.f32 1.0, %v31
    %v33 = vmul.f32 %v30, %v32
    %v34 = vadd.f32 %v30, %v33
    %vm35 = vweird.f32 %v29
    %vm36 = vweird.f32 %v30
    %vm37 = vmor %vm35, %vm36
    %v38 = vsel %vm37, %v30, %v34
    %v39 = vand.u32 2147483647, %v29
    %vm40 = vcmp.eq.f32.partialorder %v39, 8.507059e+37
    %v41 = vand.u32 %v29, 2147483648
    %v42 = vor.u32 1.1754944e-38, %v41
    %v43 = vsel %vm40, %v42, %v38
    %v44 = vmul.f32 %v26, %v43
    %v45 = vsel %vm19, %v44, 1000.0
    %46 = vst [vmem:[#allocation2] sm:$0xff] %v45
    // Predicated region
    $region10: #{pairwise_forward.3} parent=1 // pred_check
      _
    $region11: #{pairwise_forward.3} parent=1 // pred_check_branch
      %48 = sbr.rel (0) target = $region13
    $region12: #{pairwise_forward.3} parent=1 // pred_region
      %50 = vsyncadd [#allocation3], 0
      %s52 = sshll.u32 [#allocation2], 4
      %s53 = int_to_ptr.vmem [resolvable:$true] %s52
      %s54 = sshll.u32 %s2, 4
      %s55 = int_to_ptr.hbm [resolvable:$true] %s54
      %57 = dma.vmem_to_hbm [thread:$0]  %s53, 128, %s55, [#allocation3]
    $region13: #{pairwise_forward.3} parent=1 // pred_fallthru
      _
    // Predicated region
    $region14: #{pairwise_forward.3} parent=1 // pred_check
      _
    $region15: #{pairwise_forward.3} parent=1 // pred_check_branch
      %59 = sbr.rel (0) target = $region17
    $region16: #{pairwise_forward.3} parent=1 // pred_region
      %61 = dma.done [#allocation3], 128
    $region17: #{pairwise_forward.3} parent=1 // pred_fallthru
      _
    %62 = vsyncpa [#allocation3], 1

// kernel: pairwise_forward.2
$region0: #{pairwise_forward.2}
  #allocation0 [shape = 'u32[]', space=smem, size = 0x4, offset = 0x4, fixed_abs, tag = 'smem constant byte address 0x4 - core index']
  #allocation1 [shape = 'u32[72,128]{1,0:T(1,128)}', space=vmem, size = 0x9000, scoped, tag = 'internal scratch']
  %s0 = inlined_call_operand.vmem [shape: bf16[128,256], index: 0, kind: input, shape index: {}]
  %s1 = inlined_call_operand.vmem [shape: f32[1,256], index: 1, kind: input, shape index: {}]
  %s2 = inlined_call_operand.vmem [shape: f32[64,128], index: 2, kind: input, shape index: {}]
  %s3 = inlined_call_operand.vmem [shape: f32[64,64], index: 3, kind: input, shape index: {}]
  %s4 = inlined_call_operand.vmem [shape: f32[64,128], index: 4, kind: input, shape index: {}]
  %s5 = inlined_call_operand.vmem [shape: f32[1,256], index: 5, kind: output, shape index: {}]
  %s6 = sld [smem:[#allocation0]]
  $region30: #{pairwise_forward.2} parent=0
    _
  %s8 = ssub.s32 1, %s6
  %s9 = scalar_select 0, %s8, %s6
  // Predicated region
  $region2: #{pairwise_forward.2} parent=0 // pred_check
    _
  $region3: #{pairwise_forward.2} parent=0 // pred_check_branch
    %11 = sbr.rel (0) target = $region5
  $region4: #{pairwise_forward.2} parent=0 // pred_region
    _
  $region5: #{pairwise_forward.2} parent=0 // pred_fallthru
    _
  // Predicated region
  $region6: #{pairwise_forward.2} parent=0 // pred_check
    _
  $region7: #{pairwise_forward.2} parent=0 // pred_check_branch
    %13 = sbr.rel (0) target = $region9
  $region8: #{pairwise_forward.2} parent=0 // pred_region
    _
  $region9: #{pairwise_forward.2} parent=0 // pred_fallthru
    _
  // Predicated region
  $region10: #{pairwise_forward.2} parent=0 // pred_check
    _
  $region11: #{pairwise_forward.2} parent=0 // pred_check_branch
    %15 = sbr.rel (0) target = $region13
  $region12: #{pairwise_forward.2} parent=0 // pred_region
    _
  $region13: #{pairwise_forward.2} parent=0 // pred_fallthru
    _
  // Predicated region
  $region14: #{pairwise_forward.2} parent=0 // pred_check
    _
  $region15: #{pairwise_forward.2} parent=0 // pred_check_branch
    %17 = sbr.rel (0) target = $region17
  $region16: #{pairwise_forward.2} parent=0 // pred_region
    _
  $region17: #{pairwise_forward.2} parent=0 // pred_fallthru
    _
  // Predicated region
  $region18: #{pairwise_forward.2} parent=0 // pred_check
    _
  $region19: #{pairwise_forward.2} parent=0 // pred_check_branch
    %19 = sbr.rel (0) target = $region21
  $region20: #{pairwise_forward.2} parent=0 // pred_region
    _
  $region21: #{pairwise_forward.2} parent=0 // pred_fallthru
    _
  %v20 = vld [vmem:[%s0] sm:$0xff]
  %v21 = vld [vmem:[%s0 + $0x8] sm:$0xff]
  %v22 = vld [vmem:[%s0 + $0x10] sm:$0xff]
  %v23 = vld [vmem:[%s0 + $0x18] sm:$0xff]
  %v24 = vld [vmem:[%s0 + $0x20] sm:$0xff]
  %v25 = vld [vmem:[%s0 + $0x28] sm:$0xff]
  %v26 = vld [vmem:[%s0 + $0x30] sm:$0xff]
  %v27 = vld [vmem:[%s0 + $0x38] sm:$0xff]
  %v28 = vld [vmem:[%s0 + $0x40] sm:$0xff]
  %v29 = vld [vmem:[%s0 + $0x48] sm:$0xff]
  %v30 = vld [vmem:[%s0 + $0x50] sm:$0xff]
  %v31 = vld [vmem:[%s0 + $0x58] sm:$0xff]
  %v32 = vld [vmem:[%s0 + $0x60] sm:$0xff]
  %v33 = vld [vmem:[%s0 + $0x68] sm:$0xff]
  %v34 = vld [vmem:[%s0 + $0x70] sm:$0xff]
  %v35 = vld [vmem:[%s0 + $0x78] sm:$0xff]
  %v36 = vunpack.c.l.bf16 %v20
  %v37 = vunpack.c.h.bf16 %v20
  %v38 = vunpack.c.l.bf16 %v21
  %v39 = vunpack.c.h.bf16 %v21
  %v40 = vunpack.c.l.bf16 %v22
  %v41 = vunpack.c.h.bf16 %v22
  %v42 = vunpack.c.l.bf16 %v23
  %v43 = vunpack.c.h.bf16 %v23
  %v44 = vunpack.c.l.bf16 %v24
  %v45 = vunpack.c.h.bf16 %v24
  %v46 = vunpack.c.l.bf16 %v25
  %v47 = vunpack.c.h.bf16 %v25
  %v48 = vunpack.c.l.bf16 %v26
  %v49 = vunpack.c.h.bf16 %v26
  %v50 = vunpack.c.l.bf16 %v27
  %v51 = vunpack.c.h.bf16 %v27
  %v52 = vunpack.c.l.bf16 %v28
  %v53 = vunpack.c.h.bf16 %v28
  %v54 = vunpack.c.l.bf16 %v29
  %v55 = vunpack.c.h.bf16 %v29
  %v56 = vunpack.c.l.bf16 %v30
  %v57 = vunpack.c.h.bf16 %v30
  %v58 = vunpack.c.l.bf16 %v31
  %v59 = vunpack.c.h.bf16 %v31
  %v60 = vunpack.c.l.bf16 %v32
  %v61 = vunpack.c.h.bf16 %v32
  %v62 = vunpack.c.l.bf16 %v33
  %v63 = vunpack.c.h.bf16 %v33
  %v64 = vunpack.c.l.bf16 %v34
  %v65 = vunpack.c.h.bf16 %v34
  %v66 = vunpack.c.l.bf16 %v35
  %v67 = vunpack.c.h.bf16 %v35
  %v68 = vld [vmem:[%s4] sm:$0xff]
  %v69 = vld [vmem:[%s4 + $0x8] sm:$0xff]
  %v70 = vld [vmem:[%s4 + $0x10] sm:$0xff]
  %v71 = vld [vmem:[%s4 + $0x18] sm:$0xff]
  %v72 = vld [vmem:[%s4 + $0x20] sm:$0xff]
  %v73 = vld [vmem:[%s4 + $0x28] sm:$0xff]
  %v74 = vld [vmem:[%s4 + $0x30] sm:$0xff]
  %v75 = vld [vmem:[%s4 + $0x38] sm:$0xff]
  %v76 = vld [vmem:[%s2] sm:$0xff]
  %v77 = vld [vmem:[%s2 + $0x8] sm:$0xff]
  %v78 = vld [vmem:[%s2 + $0x10] sm:$0xff]
  %v79 = vld [vmem:[%s2 + $0x18] sm:$0xff]
  %v80 = vld [vmem:[%s2 + $0x20] sm:$0xff]
  %v81 = vld [vmem:[%s2 + $0x28] sm:$0xff]
  %v82 = vld [vmem:[%s2 + $0x30] sm:$0xff]
  %v83 = vld [vmem:[%s2 + $0x38] sm:$0xff]
  %85 = vset.pattern.permute.xlu0 0
  %86 = vperm.xlu0 %85, %v68
  %v87 = vpop.permute.xlu0 %86
  %90 = vset.pattern.permute.xlu0 0
  %91 = vperm.xlu0 %90, %v69
  %v92 = vpop.permute.xlu0 %91
  %95 = vset.pattern.permute.xlu0 0
  %96 = vperm.xlu0 %95, %v70
  %v97 = vpop.permute.xlu0 %96
  %100 = vset.pattern.permute.xlu0 0
  %101 = vperm.xlu0 %100, %v71
  %v102 = vpop.permute.xlu0 %101
  %105 = vset.pattern.permute.xlu0 0
  %106 = vperm.xlu0 %105, %v72
  %v107 = vpop.permute.xlu0 %106
  %110 = vset.pattern.permute.xlu0 0
  %111 = vperm.xlu0 %110, %v73
  %v112 = vpop.permute.xlu0 %111
  %115 = vset.pattern.permute.xlu0 0
  %116 = vperm.xlu0 %115, %v74
  %v117 = vpop.permute.xlu0 %116
  %120 = vset.pattern.permute.xlu0 0
  %121 = vperm.xlu0 %120, %v75
  %v122 = vpop.permute.xlu0 %121
  %124 = vmatpush.msra.mxu0 %v66
  %125 = vmatpush.msra.mxu0 %v64
  %126 = vmatpush.msra.mxu0 %v62
  %127 = vmatpush.msra.mxu0 %v60
  %128 = vmatpush.msra.mxu0 %v58
  %129 = vmatpush.msra.mxu0 %v56
  %130 = vmatpush.msra.mxu0 %v54
  %131 = vmatpush.msra.mxu0 %v52
  %132 = vmatpush.msra.mxu0 %v50
  %133 = vmatpush.msra.mxu0 %v48
  %134 = vmatpush.msra.mxu0 %v46
  %135 = vmatpush.msra.mxu0 %v44
  %136 = vmatpush.msra.mxu0 %v42
  %137 = vmatpush.msra.mxu0 %v40
  %138 = vmatpush.msra.mxu0 %v38
  %139 = vmatpush.msra.mxu0 %v36
  %140 = vmatmul.f32.gmra.mxu0 %v76
  %v141 = vpop.f32.mrf.mxu0
  %v142 = vadd.f32 %v87, %v141
  %143 = vmatmul.f32.gmra.mxu0 %v77
  %v144 = vpop.f32.mrf.mxu0
  %v145 = vadd.f32 %v92, %v144
  %146 = vmatmul.f32.gmra.mxu0 %v78
  %v147 = vpop.f32.mrf.mxu0
  %v148 = vadd.f32 %v97, %v147
  %149 = vmatmul.f32.gmra.mxu0 %v79
  %v150 = vpop.f32.mrf.mxu0
  %v151 = vadd.f32 %v102, %v150
  %152 = vmatmul.f32.gmra.mxu0 %v80
  %v153 = vpop.f32.mrf.mxu0
  %v154 = vadd.f32 %v107, %v153
  %155 = vmatmul.f32.gmra.mxu0 %v81
  %v156 = vpop.f32.mrf.mxu0
  %v157 = vadd.f32 %v112, %v156
  %158 = vmatmul.f32.gmra.mxu0 %v82
  %v159 = vpop.f32.mrf.mxu0
  %v160 = vadd.f32 %v117, %v159
  %161 = vmatmul.f32.gmra.mxu0 %v83
  %v162 = vpop.f32.mrf.mxu0
  %v163 = vadd.f32 %v122, %v162
  %164 = vdwg.mxu0
  %165 = vmatpush.msra.mxu0 %v67
  %166 = vmatpush.msra.mxu0 %v65
  %167 = vmatpush.msra.mxu0 %v63
  %168 = vmatpush.msra.mxu0 %v61
  %169 = vmatpush.msra.mxu0 %v59
  %170 = vmatpush.msra.mxu0 %v57
  %171 = vmatpush.msra.mxu0 %v55
  %172 = vmatpush.msra.mxu0 %v53
  %173 = vmatpush.msra.mxu0 %v51
  %174 = vmatpush.msra.mxu0 %v49
  %175 = vmatpush.msra.mxu0 %v47
  %176 = vmatpush.msra.mxu0 %v45
  %177 = vmatpush.msra.mxu0 %v43
  %178 = vmatpush.msra.mxu0 %v41
  %179 = vmatpush.msra.mxu0 %v39
  %180 = vmatpush.msra.mxu0 %v37
  %181 = vmatmul.f32.gmra.mxu0 %v76
  %v182 = vpop.f32.mrf.mxu0
  %v183 = vadd.f32 %v87, %v182
  %184 = vmatmul.f32.gmra.mxu0 %v77
  %v185 = vpop.f32.mrf.mxu0
  %v186 = vadd.f32 %v92, %v185
  %187 = vmatmul.f32.gmra.mxu0 %v78
  %v188 = vpop.f32.mrf.mxu0
  %v189 = vadd.f32 %v97, %v188
  %190 = vmatmul.f32.gmra.mxu0 %v79
  %v191 = vpop.f32.mrf.mxu0
  %v192 = vadd.f32 %v102, %v191
  %193 = vmatmul.f32.gmra.mxu0 %v80
  %v194 = vpop.f32.mrf.mxu0
  %v195 = vadd.f32 %v107, %v194
  %196 = vmatmul.f32.gmra.mxu0 %v81
  %v197 = vpop.f32.mrf.mxu0
  %v198 = vadd.f32 %v112, %v197
  %199 = vmatmul.f32.gmra.mxu0 %v82
  %v200 = vpop.f32.mrf.mxu0
  %v201 = vadd.f32 %v117, %v200
  %202 = vmatmul.f32.gmra.mxu0 %v83
  %v203 = vpop.f32.mrf.mxu0
  %v204 = vadd.f32 %v122, %v203
  %205 = vdwg.mxu0
  %v206 = vmax.f32 %v142, 0.0
  %v207 = vmax.f32 %v183, 0.0
  %v208 = vmax.f32 %v145, 0.0
  %v209 = vmax.f32 %v186, 0.0
  %v210 = vmax.f32 %v148, 0.0
  %v211 = vmax.f32 %v189, 0.0
  %v212 = vmax.f32 %v151, 0.0
  %v213 = vmax.f32 %v192, 0.0
  %v214 = vmax.f32 %v154, 0.0
  %v215 = vmax.f32 %v195, 0.0
  %v216 = vmax.f32 %v157, 0.0
  %v217 = vmax.f32 %v198, 0.0
  %v218 = vmax.f32 %v160, 0.0
  %v219 = vmax.f32 %v201, 0.0
  %v220 = vmax.f32 %v163, 0.0
  %v221 = vmax.f32 %v204, 0.0
  %v222 = vld [vmem:[%s3] sm:$0xff]
  %v223 = vld [vmem:[%s3 + $0x8] sm:$0xff]
  %v224 = vld [vmem:[%s3 + $0x10] sm:$0xff]
  %v225 = vld [vmem:[%s3 + $0x18] sm:$0xff]
  %v226 = vld [vmem:[%s3 + $0x20] sm:$0xff]
  %v227 = vld [vmem:[%s3 + $0x28] sm:$0xff]
  %v228 = vld [vmem:[%s3 + $0x30] sm:$0xff]
  %v229 = vld [vmem:[%s3 + $0x38] sm:$0xff]
  %230 = vset.pattern.permute.xlu0 1
  %231 = vperm.xlu0 %230, %v68
  %v232 = vpop.permute.xlu0 %231
  %234 = vset.pattern.permute.xlu0 1
  %235 = vperm.xlu0 %234, %v69
  %v236 = vpop.permute.xlu0 %235
  %238 = vset.pattern.permute.xlu0 1
  %239 = vperm.xlu0 %238, %v70
  %v240 = vpop.permute.xlu0 %239
  %242 = vset.pattern.permute.xlu0 1
  %243 = vperm.xlu0 %242, %v71
  %v244 = vpop.permute.xlu0 %243
  %246 = vset.pattern.permute.xlu0 1
  %247 = vperm.xlu0 %246, %v72
  %v248 = vpop.permute.xlu0 %247
  %250 = vset.pattern.permute.xlu0 1
  %251 = vperm.xlu0 %250, %v73
  %v252 = vpop.permute.xlu0 %251
  %254 = vset.pattern.permute.xlu0 1
  %255 = vperm.xlu0 %254, %v74
  %v256 = vpop.permute.xlu0 %255
  %258 = vset.pattern.permute.xlu0 1
  %259 = vperm.xlu0 %258, %v75
  %v260 = vpop.permute.xlu0 %259
  %vm262 = vcmask 523264
  %v264 = vsel %vm262, %v222, 0
  %v267 = vsel %vm262, %v223, 0
  %v270 = vsel %vm262, %v224, 0
  %v273 = vsel %vm262, %v225, 0
  %v276 = vsel %vm262, %v226, 0
  %v279 = vsel %vm262, %v227, 0
  %v282 = vsel %vm262, %v228, 0
  %v285 = vsel %vm262, %v229, 0
  %287 = vmatpush.msra.mxu0 0.0
  %288 = vmatpush.msra.mxu0 0.0
  %289 = vmatpush.msra.mxu0 0.0
  %290 = vmatpush.msra.mxu0 0.0
  %291 = vmatpush.msra.mxu0 0.0
  %292 = vmatpush.msra.mxu0 0.0
  %293 = vmatpush.msra.mxu0 0.0
  %294 = vmatpush.msra.mxu0 0.0
  %295 = vmatpush.msra.mxu0 %v220
  %296 = vmatpush.msra.mxu0 %v218
  %297 = vmatpush.msra.mxu0 %v216
  %298 = vmatpush.msra.mxu0 %v214
  %299 = vmatpush.msra.mxu0 %v212
  %300 = vmatpush.msra.mxu0 %v210
  %301 = vmatpush.msra.mxu0 %v208
  %302 = vmatpush.msra.mxu0 %v206
  %303 = vmatmul.f32.gmra.mxu0 %v264
  %v304 = vpop.f32.mrf.mxu0
  %v305 = vadd.f32 %v232, %v304
  %306 = vmatmul.f32.gmra.mxu0 %v267
  %v307 = vpop.f32.mrf.mxu0
  %v308 = vadd.f32 %v236, %v307
  %309 = vmatmul.f32.gmra.mxu0 %v270
  %v310 = vpop.f32.mrf.mxu0
  %v311 = vadd.f32 %v240, %v310
  %312 = vmatmul.f32.gmra.mxu0 %v273
  %v313 = vpop.f32.mrf.mxu0
  %v314 = vadd.f32 %v244, %v313
  %315 = vmatmul.f32.gmra.mxu0 %v276
  %v316 = vpop.f32.mrf.mxu0
  %v317 = vadd.f32 %v248, %v316
  %318 = vmatmul.f32.gmra.mxu0 %v279
  %v319 = vpop.f32.mrf.mxu0
  %v320 = vadd.f32 %v252, %v319
  %321 = vmatmul.f32.gmra.mxu0 %v282
  %v322 = vpop.f32.mrf.mxu0
  %v323 = vadd.f32 %v256, %v322
  %324 = vmatmul.f32.gmra.mxu0 %v285
  %v325 = vpop.f32.mrf.mxu0
  %v326 = vadd.f32 %v260, %v325
  %327 = vdwg.mxu0
  %328 = vmatpush.msra.mxu0 0.0
  %329 = vmatpush.msra.mxu0 0.0
  %330 = vmatpush.msra.mxu0 0.0
  %331 = vmatpush.msra.mxu0 0.0
  %332 = vmatpush.msra.mxu0 0.0
  %333 = vmatpush.msra.mxu0 0.0
  %334 = vmatpush.msra.mxu0 0.0
  %335 = vmatpush.msra.mxu0 0.0
  %336 = vmatpush.msra.mxu0 %v221
  %337 = vmatpush.msra.mxu0 %v219
  %338 = vmatpush.msra.mxu0 %v217
  %339 = vmatpush.msra.mxu0 %v215
  %340 = vmatpush.msra.mxu0 %v213
  %341 = vmatpush.msra.mxu0 %v211
  %342 = vmatpush.msra.mxu0 %v209
  %343 = vmatpush.msra.mxu0 %v207
  %344 = vmatmul.f32.gmra.mxu0 %v264
  %v345 = vpop.f32.mrf.mxu0
  %v346 = vadd.f32 %v232, %v345
  %347 = vmatmul.f32.gmra.mxu0 %v267
  %v348 = vpop.f32.mrf.mxu0
  %v349 = vadd.f32 %v236, %v348
  %350 = vmatmul.f32.gmra.mxu0 %v270
  %v351 = vpop.f32.mrf.mxu0
  %v352 = vadd.f32 %v240, %v351
  %353 = vmatmul.f32.gmra.mxu0 %v273
  %v354 = vpop.f32.mrf.mxu0
  %v355 = vadd.f32 %v244, %v354
  %356 = vmatmul.f32.gmra.mxu0 %v276
  %v357 = vpop.f32.mrf.mxu0
  %v358 = vadd.f32 %v248, %v357
  %359 = vmatmul.f32.gmra.mxu0 %v279
  %v360 = vpop.f32.mrf.mxu0
  %v361 = vadd.f32 %v252, %v360
  %362 = vmatmul.f32.gmra.mxu0 %v282
  %v363 = vpop.f32.mrf.mxu0
  %v364 = vadd.f32 %v256, %v363
  %365 = vmatmul.f32.gmra.mxu0 %v285
  %v366 = vpop.f32.mrf.mxu0
  %v367 = vadd.f32 %v260, %v366
  %368 = vdwg.mxu0
  %v369 = vmax.f32 %v305, 0.0
  %v370 = vmax.f32 %v346, 0.0
  %v371 = vmax.f32 %v308, 0.0
  %v372 = vmax.f32 %v349, 0.0
  %v373 = vmax.f32 %v311, 0.0
  %v374 = vmax.f32 %v352, 0.0
  %v375 = vmax.f32 %v314, 0.0
  %v376 = vmax.f32 %v355, 0.0
  %v377 = vmax.f32 %v317, 0.0
  %v378 = vmax.f32 %v358, 0.0
  %v379 = vmax.f32 %v320, 0.0
  %v380 = vmax.f32 %v361, 0.0
  %v381 = vmax.f32 %v323, 0.0
  %v382 = vmax.f32 %v364, 0.0
  %v383 = vmax.f32 %v326, 0.0
  %v384 = vmax.f32 %v367, 0.0
  %385 = vset.pattern.permute.xlu0 2
  %386 = vperm.xlu0 %385, %v68
  %v387 = vpop.permute.xlu0 %386
  %389 = vset.pattern.permute.xlu0 2
  %390 = vperm.xlu0 %389, %v69
  %v391 = vpop.permute.xlu0 %390
  %393 = vset.pattern.permute.xlu0 2
  %394 = vperm.xlu0 %393, %v70
  %v395 = vpop.permute.xlu0 %394
  %397 = vset.pattern.permute.xlu0 2
  %398 = vperm.xlu0 %397, %v71
  %v399 = vpop.permute.xlu0 %398
  %401 = vset.pattern.permute.xlu0 2
  %402 = vperm.xlu0 %401, %v72
  %v403 = vpop.permute.xlu0 %402
  %405 = vset.pattern.permute.xlu0 2
  %406 = vperm.xlu0 %405, %v73
  %v407 = vpop.permute.xlu0 %406
  %409 = vset.pattern.permute.xlu0 2
  %410 = vperm.xlu0 %409, %v74
  %v411 = vpop.permute.xlu0 %410
  %413 = vset.pattern.permute.xlu0 2
  %414 = vperm.xlu0 %413, %v75
  %v415 = vpop.permute.xlu0 %414
  %v417 = vmul.f32 %v369, %v387
  %v418 = vmul.f32 %v370, %v387
  %v419 = vmul.f32 %v371, %v391
  %v420 = vmul.f32 %v372, %v391
  %v421 = vmul.f32 %v373, %v395
  %v422 = vmul.f32 %v374, %v395
  %v423 = vmul.f32 %v375, %v399
  %v424 = vmul.f32 %v376, %v399
  %v425 = vmul.f32 %v377, %v403
  %v426 = vmul.f32 %v378, %v403
  %v427 = vmul.f32 %v379, %v407
  %v428 = vmul.f32 %v380, %v407
  %v429 = vmul.f32 %v381, %v411
  %v430 = vmul.f32 %v382, %v411
  %v431 = vmul.f32 %v383, %v415
  %v432 = vmul.f32 %v384, %v415
  %v433 = vadd.f32 %v417, %v419
  %v434 = vadd.f32 %v433, %v421
  %v435 = vadd.f32 %v434, %v423
  %v436 = vadd.f32 %v435, %v425
  %v437 = vadd.f32 %v436, %v427
  %v438 = vadd.f32 %v437, %v429
  %v439 = vadd.f32 %v438, %v431
  %v440 = vrot.slane %v439, 4
  %v441 = vadd.f32 %v439, %v440
  %v442 = vrot.slane %v441, 2
  %v443 = vadd.f32 %v441, %v442
  %v444 = vrot.slane %v443, 1
  %v445 = vadd.f32 %v443, %v444
  %v446 = vadd.f32 %v418, %v420
  %v447 = vadd.f32 %v446, %v422
  %v448 = vadd.f32 %v447, %v424
  %v449 = vadd.f32 %v448, %v426
  %v450 = vadd.f32 %v449, %v428
  %v451 = vadd.f32 %v450, %v430
  %v452 = vadd.f32 %v451, %v432
  %v453 = vrot.slane %v452, 4
  %v454 = vadd.f32 %v452, %v453
  %v455 = vrot.slane %v454, 2
  %v456 = vadd.f32 %v454, %v455
  %v457 = vrot.slane %v456, 1
  %v458 = vadd.f32 %v456, %v457
  %v459 = vld [vmem:[%s1] sm:$0x3]
  %v462 = vrot.slane %v458, 7
  %vm463 = vcmask 1040384
  %v464 = vsel %vm463, %v445, %v462
  %v466 = vadd.f32 %v459, %v464
  %v467 = vlaneseq
  %vm468 = vcmp.ge.s32.totalorder %v467, 0
  %vm469 = vcmp.lt.s32.totalorder %v467, 256
  %vm470 = vmand %vm468, %vm469
  %471 = vst.msk [vmem:[%s5] sm:$0x3] %vm470, %v466
  // Predicated region
  $region22: #{pairwise_forward.2} parent=0 // pred_check
    _
  $region23: #{pairwise_forward.2} parent=0 // pred_check_branch
    %473 = sbr.rel (0) target = $region25
  $region24: #{pairwise_forward.2} parent=0 // pred_region
    _
  $region25: #{pairwise_forward.2} parent=0 // pred_fallthru
    _
  // Predicated region
  $region26: #{pairwise_forward.2} parent=0 // pred_check
    _
  $region27: #{pairwise_forward.2} parent=0 // pred_check_branch
    %475 = sbr.rel (0) target = $region29
  $region28: #{pairwise_forward.2} parent=0 // pred_region
    _
  $region29: #{pairwise_forward.2} parent=0 // pred_fallthru
    _

</llo_original>
